<compile_context>
chip_gen: v7x
topology: tpu7x:2x2x1
jax: 0.10.0
libtpu: 0.0.40
codegen_flags: <defaults>
</compile_context>

<pallas_src>
import jax
import jax.numpy as jnp
from jax.experimental import pallas as pl
from jax.experimental.pallas import tpu as pltpu

HIDDEN1 = 120
HIDDEN2 = 84
OUT_FEATURES = 50
LANE = 128


def _round_up(x, m):
    return (x + m - 1) // m * m


def fcn_kernel(x_ref, w1_ref, b1_ref, w2_ref, b2_ref, w3_ref, b3_ref, o_ref):
    # Three MXU matmuls (bf16 inputs, f32 accumulation) + f32 bias/ReLU on VPU.
    x = x_ref[...]  # already bf16 -- DMA'd narrow, no in-kernel cast of x

    h1 = jnp.dot(x, w1_ref[...], preferred_element_type=jnp.float32) + b1_ref[...]
    h1 = jnp.maximum(h1, 0.0)

    h2 = jnp.dot(h1.astype(jnp.bfloat16), w2_ref[...],
                 preferred_element_type=jnp.float32) + b2_ref[...]
    h2 = jnp.maximum(h2, 0.0)

    o_ref[...] = jnp.dot(h2.astype(jnp.bfloat16), w3_ref[...],
                         preferred_element_type=jnp.float32) + b3_ref[...]


def init_params(row_num, col_num, key):
    """Synthetic params matching nn.Linear shapes, stored as (in, out) f32.

    fc1: (row*col -> 120), fc2: (120 -> 84), fc3: (84 -> 50). Biases (1, out).
    """
    d_in = row_num * col_num
    dims = [(d_in, HIDDEN1), (HIDDEN1, HIDDEN2), (HIDDEN2, OUT_FEATURES)]
    keys = jax.random.split(key, 6)
    params = []
    for i, (din, dout) in enumerate(dims):
        bound = 1.0 / jnp.sqrt(jnp.float32(din))
        w = jax.random.uniform(keys[2 * i], (din, dout), jnp.float32, -bound, bound)
        b = jax.random.uniform(keys[2 * i + 1], (1, dout), jnp.float32, -bound, bound)
        params += [w, b]
    return tuple(params)


def prepare_params(params):
    """Lane-pad output feature dims to 128 and cast weights to bf16.

    W1 keeps its K dim == C*H*W exactly (so x needs no feature padding).
    Biases stay f32 (added to the f32 accumulator). Padded weight columns /
    bias entries are zero, so padded channels stay exactly zero through ReLU
    and the next matmul -> numerically identical to the unpadded computation.
    """
    w1, b1, w2, b2, w3, b3 = params

    def pad_to(a, shape):
        return jnp.pad(a, [(0, t - s) for s, t in zip(a.shape, shape)])

    w1p = pad_to(w1, (w1.shape[0], LANE)).astype(jnp.bfloat16)   # K unchanged
    w2p = pad_to(w2, (LANE, LANE)).astype(jnp.bfloat16)
    w3p = pad_to(w3, (LANE, LANE)).astype(jnp.bfloat16)
    b1p = pad_to(b1, (1, LANE))
    b2p = pad_to(b2, (1, LANE))
    b3p = pad_to(b3, (1, LANE))
    return (w1p, b1p, w2p, b2p, w3p, b3p)


def fcn_forward(x_nchw, padded_params, *, tm_max=2048, return_padded=False):
    """x_nchw: (N, C, H, W). Returns (N, 50) f32, or the lane-dense (N, 128) block."""
    n = x_nchw.shape[0]
    d = x_nchw.shape[1] * x_nchw.shape[2] * x_nchw.shape[3]
    w1, b1, w2, b2, w3, b3 = padded_params
    assert w1.shape[0] == d, (w1.shape, d)

    # Row-major flatten (same as torch .view) is free; DMA x as bf16 -- x is
    # the dominant HBM stream, so halving it is the biggest byte reduction.
    # In a real pipeline feed bf16 directly / let this cast fuse into the
    # producer; accumulation is f32 so only x itself is quantized.
    x_in = x_nchw.reshape(n, d).astype(jnp.bfloat16)

    # Batch tiling: balanced tiles + ragged last tile (no padding of N).
    #  - >= 2 grid steps whenever N > 16 so the "parallel" axis shards across
    #    both TensorCores on v7x.
    #  - TM multiple of 16 (bf16 sublane packing); even TM=2048 is only a few
    #    MiB of VMEM on every generation.
    if n <= 16:
        tm = n                                    # single full-extent block
    else:
        n_steps = max(pl.cdiv(n, tm_max), 2)
        tm = min(_round_up(pl.cdiv(n, n_steps), 16), tm_max)
    num_steps = pl.cdiv(n, tm)

    resident = lambda i: (0, 0)  # weights/biases: same block every step -> stay VMEM-resident
    x_index = lambda i: (i, 0)

    x_spec = pl.BlockSpec((tm, d), x_index)
    if num_steps >= 3 and hasattr(pl, "Buffered"):
        try:
            # Deeper pipelining on the x stream hides DMA jitter; costs one
            # extra tm x d bf16 tile of VMEM (trivial here).
            x_spec = pl.BlockSpec((tm, d), x_index, pipeline_mode=pl.Buffered(3))
        except TypeError:
            pass  # older jax without pipeline_mode: default double-buffering

    cost = pl.CostEstimate(
        flops=2 * n * (d * HIDDEN1 + HIDDEN1 * HIDDEN2 + HIDDEN2 * OUT_FEATURES),
        transcendentals=0,
        bytes_accessed=(int(x_in.size) * 2
                        + sum(int(p.size) * p.dtype.itemsize for p in padded_params)
                        + n * LANE * 4),
    )

    out_padded = pl.pallas_call(
        fcn_kernel,
        out_shape=jax.ShapeDtypeStruct((n, LANE), jnp.float32),
        grid=(num_steps,),
        in_specs=[
            x_spec,
            pl.BlockSpec((d, LANE), resident),
            pl.BlockSpec((1, LANE), resident),
            pl.BlockSpec((LANE, LANE), resident),
            pl.BlockSpec((1, LANE), resident),
            pl.BlockSpec((LANE, LANE), resident),
            pl.BlockSpec((1, LANE), resident),
        ],
        out_specs=pl.BlockSpec((tm, LANE), lambda i: (i, 0)),
        compiler_params=pltpu.CompilerParams(dimension_semantics=("parallel",)),
        cost_estimate=cost,
    )(x_in, w1, b1, w2, b2, w3, b3)

    if return_padded:
        # Lane-dense (N, 128); columns 50..127 are exact zeros. Consuming this
        # directly lets downstream ops fuse the slice and skips a copy pass.
        return out_padded
    return out_padded[:, :OUT_FEATURES]


def fcn_reference(x_nchw, params, use_bf16=False):
    """Pure-JAX reference. use_bf16=True mirrors the kernel's bf16 MXU casts."""
    n = x_nchw.shape[0]
    x = x_nchw.reshape(n, -1)
    w1, b1, w2, b2, w3, b3 = params
    cast = (lambda a: a.astype(jnp.bfloat16)) if use_bf16 else (lambda a: a)
    h = jnp.maximum(jnp.dot(cast(x), cast(w1), preferred_element_type=jnp.float32) + b1, 0.0)
    h = jnp.maximum(jnp.dot(cast(h), cast(w2), preferred_element_type=jnp.float32) + b2, 0.0)
    return jnp.dot(cast(h), cast(w3), preferred_element_type=jnp.float32) + b3


if __name__ == "__main__":
    key = jax.random.PRNGKey(0)
    k_x, k_p, k_x2 = jax.random.split(key, 3)

    # rowNum=16, colNum=16  =>  input must flatten to 256 features => C=1.
    batch, chan, row_num, col_num = 2, 1, 16, 16
    x = jax.random.normal(k_x, (batch, chan, row_num, col_num), jnp.float32)

    params = init_params(row_num, col_num, k_p)      # true-shape f32 (module spec)
    padded_params = prepare_params(params)           # lane-padded, bf16 weights

    # --- small batch: single full-extent block path ---
    out = jax.block_until_ready(fcn_forward(x, padded_params))
    assert out.shape == (batch, OUT_FEATURES), out.shape

    ref_bf16 = fcn_reference(x, params, use_bf16=True)
    assert jnp.allclose(out, ref_bf16, atol=2e-3, rtol=2e-3), "mismatch vs bf16 reference"
    ref_f32 = fcn_reference(x, params, use_bf16=False)
    assert jnp.allclose(out, ref_f32, atol=5e-2, rtol=5e-2), "mismatch vs f32 reference"

    # --- large ragged batch: multi-step grid (megacore sharding), balanced
    # tiles, ragged last tile, Buffered(3) on the x stream ---
    batch2 = 4100
    x2 = jax.random.normal(k_x2, (batch2, chan, row_num, col_num), jnp.float32)
    out2 = jax.block_until_ready(fcn_forward(x2, padded_params))
    assert out2.shape == (batch2, OUT_FEATURES), out2.shape
    ref2 = fcn_reference(x2, params, use_bf16=True)
    assert jnp.allclose(out2, ref2, atol=2e-3, rtol=2e-3), "mismatch vs bf16 reference (ragged)"

    print("KERNEL_OK")
</pallas_src>

<mosaic_0001>
module attributes {stable_mosaic.version = 11 : i64} {
  func.func @fcn_kernel(%arg0: i32, %arg1: memref<2x256xbf16, #tpu.memory_space<vmem>>, %arg2: memref<256x128xbf16, #tpu.memory_space<vmem>>, %arg3: memref<1x128xf32, #tpu.memory_space<vmem>>, %arg4: memref<128x128xbf16, #tpu.memory_space<vmem>>, %arg5: memref<1x128xf32, #tpu.memory_space<vmem>>, %arg6: memref<128x128xbf16, #tpu.memory_space<vmem>>, %arg7: memref<1x128xf32, #tpu.memory_space<vmem>>, %arg8: memref<2x128xf32, #tpu.memory_space<vmem>>) attributes {dimension_semantics = [#tpu.dimension_semantics<parallel>], iteration_bounds = array<i64: 1>, scalar_prefetch = 0 : i64, scratch_operands = 0 : i64, tpu.core_type = #tpu.core_type<tc>, window_params = [{transform_indices = @transform_0, window_bounds = array<i64: 2, 256>}, {pipeline_mode = #tpu.pipeline_mode<synchronous>, transform_indices = @transform_1, window_bounds = array<i64: 256, 128>}, {pipeline_mode = #tpu.pipeline_mode<synchronous>, transform_indices = @transform_2, window_bounds = array<i64: 1, 128>}, {pipeline_mode = #tpu.pipeline_mode<synchronous>, transform_indices = @transform_3, window_bounds = array<i64: 128, 128>}, {pipeline_mode = #tpu.pipeline_mode<synchronous>, transform_indices = @transform_4, window_bounds = array<i64: 1, 128>}, {pipeline_mode = #tpu.pipeline_mode<synchronous>, transform_indices = @transform_5, window_bounds = array<i64: 128, 128>}, {pipeline_mode = #tpu.pipeline_mode<synchronous>, transform_indices = @transform_6, window_bounds = array<i64: 1, 128>}, {transform_indices = @transform_7, window_bounds = array<i64: 2, 128>}]} {
    %c0 = arith.constant 0 : index
    %c0_0 = arith.constant 0 : index
    %0 = vector.load %arg1[%c0, %c0_0] : memref<2x256xbf16, #tpu.memory_space<vmem>>, vector<2x256xbf16>
    %c0_1 = arith.constant 0 : index
    %c0_2 = arith.constant 0 : index
    %1 = vector.load %arg2[%c0_1, %c0_2] : memref<256x128xbf16, #tpu.memory_space<vmem>>, vector<256x128xbf16>
    %cst = arith.constant dense<0.000000e+00> : vector<2x128xf32>
    %2 = tpu.matmul %0, %1, %cst {dimension_numbers = #tpu.dot_dimension_numbers<[1], [0], [0], [1], [0, 0, 1, 1], [], []>} : vector<2x256xbf16>, vector<256x128xbf16>, vector<2x128xf32> -> vector<2x128xf32>
    %c0_3 = arith.constant 0 : index
    %c0_4 = arith.constant 0 : index
    %3 = vector.load %arg3[%c0_3, %c0_4] : memref<1x128xf32, #tpu.memory_space<vmem>>, vector<1x128xf32>
    %4 = vector.broadcast %3 : vector<1x128xf32> to vector<2x128xf32>
    %5 = arith.addf %2, %4 : vector<2x128xf32>
    %cst_5 = arith.constant 0.000000e+00 : f32
    %6 = vector.broadcast %cst_5 : f32 to vector<2x128xf32>
    %7 = arith.maximumf %5, %6 : vector<2x128xf32>
    %8 = arith.truncf %7 : vector<2x128xf32> to vector<2x128xbf16>
    %c0_6 = arith.constant 0 : index
    %c0_7 = arith.constant 0 : index
    %9 = vector.load %arg4[%c0_6, %c0_7] : memref<128x128xbf16, #tpu.memory_space<vmem>>, vector<128x128xbf16>
    %cst_8 = arith.constant dense<0.000000e+00> : vector<2x128xf32>
    %10 = tpu.matmul %8, %9, %cst_8 {dimension_numbers = #tpu.dot_dimension_numbers<[1], [0], [0], [1], [0, 0, 1, 1], [], []>} : vector<2x128xbf16>, vector<128x128xbf16>, vector<2x128xf32> -> vector<2x128xf32>
    %c0_9 = arith.constant 0 : index
    %c0_10 = arith.constant 0 : index
    %11 = vector.load %arg5[%c0_9, %c0_10] : memref<1x128xf32, #tpu.memory_space<vmem>>, vector<1x128xf32>
    %12 = vector.broadcast %11 : vector<1x128xf32> to vector<2x128xf32>
    %13 = arith.addf %10, %12 : vector<2x128xf32>
    %cst_11 = arith.constant 0.000000e+00 : f32
    %14 = vector.broadcast %cst_11 : f32 to vector<2x128xf32>
    %15 = arith.maximumf %13, %14 : vector<2x128xf32>
    %16 = arith.truncf %15 : vector<2x128xf32> to vector<2x128xbf16>
    %c0_12 = arith.constant 0 : index
    %c0_13 = arith.constant 0 : index
    %17 = vector.load %arg6[%c0_12, %c0_13] : memref<128x128xbf16, #tpu.memory_space<vmem>>, vector<128x128xbf16>
    %cst_14 = arith.constant dense<0.000000e+00> : vector<2x128xf32>
    %18 = tpu.matmul %16, %17, %cst_14 {dimension_numbers = #tpu.dot_dimension_numbers<[1], [0], [0], [1], [0, 0, 1, 1], [], []>} : vector<2x128xbf16>, vector<128x128xbf16>, vector<2x128xf32> -> vector<2x128xf32>
    %c0_15 = arith.constant 0 : index
    %c0_16 = arith.constant 0 : index
    %19 = vector.load %arg7[%c0_15, %c0_16] : memref<1x128xf32, #tpu.memory_space<vmem>>, vector<1x128xf32>
    %20 = vector.broadcast %19 : vector<1x128xf32> to vector<2x128xf32>
    %21 = arith.addf %18, %20 : vector<2x128xf32>
    %c0_17 = arith.constant 0 : index
    %c0_18 = arith.constant 0 : index
    %22 = vector.load %arg8[%c0_17, %c0_18] : memref<2x128xf32, #tpu.memory_space<vmem>>, vector<2x128xf32>
    tpu.vector_store %arg8[%c0_17, %c0_18], %21 {strides = array<i32>} : memref<2x128xf32, #tpu.memory_space<vmem>>, vector<2x128xf32>,
    return
  }
  func.func @transform_0(%arg0: i32) -> (i32, i32) {
    %c0_i32 = arith.constant 0 : i32
    %c0_i32_0 = arith.constant 0 : i32
    return %arg0, %c0_i32 : i32, i32
  }
  func.func @transform_1(%arg0: i32) -> (i32, i32) {
    %c0_i32 = arith.constant 0 : i32
    %c0_i32_0 = arith.constant 0 : i32
    %c0_i32_1 = arith.constant 0 : i32
    return %c0_i32, %c0_i32_0 : i32, i32
  }
  func.func @transform_2(%arg0: i32) -> (i32, i32) {
    %c0_i32 = arith.constant 0 : i32
    %c0_i32_0 = arith.constant 0 : i32
    %c0_i32_1 = arith.constant 0 : i32
    return %c0_i32, %c0_i32_0 : i32, i32
  }
  func.func @transform_3(%arg0: i32) -> (i32, i32) {
    %c0_i32 = arith.constant 0 : i32
    %c0_i32_0 = arith.constant 0 : i32
    %c0_i32_1 = arith.constant 0 : i32
    return %c0_i32, %c0_i32_0 : i32, i32
  }
  func.func @transform_4(%arg0: i32) -> (i32, i32) {
    %c0_i32 = arith.constant 0 : i32
    %c0_i32_0 = arith.constant 0 : i32
    %c0_i32_1 = arith.constant 0 : i32
    return %c0_i32, %c0_i32_0 : i32, i32
  }
  func.func @transform_5(%arg0: i32) -> (i32, i32) {
    %c0_i32 = arith.constant 0 : i32
    %c0_i32_0 = arith.constant 0 : i32
    %c0_i32_1 = arith.constant 0 : i32
    return %c0_i32, %c0_i32_0 : i32, i32
  }
  func.func @transform_6(%arg0: i32) -> (i32, i32) {
    %c0_i32 = arith.constant 0 : i32
    %c0_i32_0 = arith.constant 0 : i32
    %c0_i32_1 = arith.constant 0 : i32
    return %c0_i32, %c0_i32_0 : i32, i32
  }
  func.func @transform_7(%arg0: i32) -> (i32, i32) {
    %c0_i32 = arith.constant 0 : i32
    %c0_i32_0 = arith.constant 0 : i32
    return %arg0, %c0_i32 : i32, i32
  }
}

</mosaic_0001>

<llo_original>
// kernel: tpu_custom_call.1
$region0: #{tpu_custom_call.1}
  #allocation0 [shape = 'u32[]', space=smem, size = 0x4, offset = 0x4, fixed_abs, tag = 'smem constant byte address 0x4 - core index']
  #allocation1 [shape = 'u32[144,128]{1,0:T(1,128)}', space=vmem, size = 0x12000, scoped, tag = 'internal scratch']
  %s0 = inlined_call_operand.hbm [shape: bf16[2,256], index: 0, kind: input, shape index: {}]
  %s1 = inlined_call_operand.hbm [shape: bf16[256,128], index: 1, kind: input, shape index: {}]
  %s2 = inlined_call_operand.vmem [shape: f32[1,128], index: 2, kind: input, shape index: {}]
  %s3 = inlined_call_operand.hbm [shape: bf16[128,128], index: 3, kind: input, shape index: {}]
  %s4 = inlined_call_operand.vmem [shape: f32[1,128], index: 4, kind: input, shape index: {}]
  %s5 = inlined_call_operand.hbm [shape: bf16[128,128], index: 5, kind: input, shape index: {}]
  %s6 = inlined_call_operand.vmem [shape: f32[1,128], index: 6, kind: input, shape index: {}]
  %s7 = inlined_call_operand.hbm [shape: f32[2,128], index: 7, kind: output, shape index: {}]
  %s8 = sld [smem:[#allocation0]]
  $region54: #{tpu_custom_call.1} parent=0
    _
  %s10 = ssub.s32 1, %s8
  %s11 = scalar_select 0, %s10, %s8
  $region1: #{tpu_custom_call.1} parent=0
    #allocation2 [shape = 'u8[1024]{0}', space=vmem, size = 0x400, scoped, tag = 'input window, operand 0, single buffered']
    #allocation3 [shape = 's32[1]{0}', space=sflag, size = 0x4, scoped, tag = 'scoped memory for tpu_custom_call.1']
    #allocation4 [shape = 's32[1]{0}', space=sflag, size = 0x4, scoped, tag = 'scoped memory for tpu_custom_call.1']
    #allocation5 [shape = 'u8[65536]{0}', space=vmem, size = 0x10000, scoped, tag = 'input window, operand 1, single buffered']
    #allocation6 [shape = 's32[1]{0}', space=sflag, size = 0x4, scoped, tag = 'scoped memory for tpu_custom_call.1']
    #allocation7 [shape = 'u8[32768]{0}', space=vmem, size = 0x8000, scoped, tag = 'input window, operand 3, single buffered']
    #allocation8 [shape = 'u8[32768]{0}', space=vmem, size = 0x8000, scoped, tag = 'input window, operand 5, single buffered']
    #allocation9 [shape = 's32[1]{0}', space=sflag, size = 0x4, scoped, tag = 'scoped memory for tpu_custom_call.1']
    #allocation10 [shape = 'u8[1024]{0}', space=vmem, size = 0x400, scoped, tag = 'output window, operand 0, single buffered']
    %12 = vsyncpa [#allocation3], 0
    %13 = vsyncpa [#allocation6], 0
    %14 = vsyncpa [#allocation9], 0
    %15 = vsyncpa [#allocation4], 0
    // Predicated region
    $region2: #{tpu_custom_call.1} parent=1 // pred_check
      _
    $region3: #{tpu_custom_call.1} parent=1 // pred_check_branch
      %17 = sbr.rel (0) target = $region5
    $region4: #{tpu_custom_call.1} parent=1 // pred_region
      %s19 = ssub.s32 32, 32
      %20 = vsyncadd [#allocation3], %s19
      %s22 = sshll.u32 [#allocation2], 4
      %s23 = int_to_ptr.vmem [resolvable:$true] %s22
      %25 = dma.hbm_to_vmem [thread:$0]  %s0, 32, %s23, [#allocation3]
    $region5: #{tpu_custom_call.1} parent=1 // pred_fallthru
      _
    // Predicated region
    $region6: #{tpu_custom_call.1} parent=1 // pred_check
      _
    $region7: #{tpu_custom_call.1} parent=1 // pred_check_branch
      %27 = sbr.rel (0) target = $region9
    $region8: #{tpu_custom_call.1} parent=1 // pred_region
      %s29 = ssub.s32 2048, 2048
      %30 = vsyncadd [#allocation6], %s29
      %s31 = sshll.u32 [#allocation5], 4
      %s32 = int_to_ptr.vmem [resolvable:$true] %s31
      %37 = dma.hbm_to_vmem [thread:$0]  %s1, 2048, %s32, [#allocation6], 64, 64, 4
    $region9: #{tpu_custom_call.1} parent=1 // pred_fallthru
      _
    // Predicated region
    $region10: #{tpu_custom_call.1} parent=1 // pred_check
      _
    $region11: #{tpu_custom_call.1} parent=1 // pred_check_branch
      %39 = sbr.rel (0) target = $region13
    $region12: #{tpu_custom_call.1} parent=1 // pred_region
      _
    $region13: #{tpu_custom_call.1} parent=1 // pred_fallthru
      _
    // Predicated region
    $region14: #{tpu_custom_call.1} parent=1 // pred_check
      _
    $region15: #{tpu_custom_call.1} parent=1 // pred_check_branch
      %41 = sbr.rel (0) target = $region17
    $region16: #{tpu_custom_call.1} parent=1 // pred_region
      %s43 = ssub.s32 1024, 1024
      %44 = vsyncadd [#allocation6], %s43
      %s45 = sshll.u32 [#allocation7], 4
      %s46 = int_to_ptr.vmem [resolvable:$true] %s45
      %51 = dma.hbm_to_vmem [thread:$0]  %s3, 1024, %s46, [#allocation6], 64, 64, 4
    $region17: #{tpu_custom_call.1} parent=1 // pred_fallthru
      _
    // Predicated region
    $region18: #{tpu_custom_call.1} parent=1 // pred_check
      _
    $region19: #{tpu_custom_call.1} parent=1 // pred_check_branch
      %53 = sbr.rel (0) target = $region21
    $region20: #{tpu_custom_call.1} parent=1 // pred_region
      _
    $region21: #{tpu_custom_call.1} parent=1 // pred_fallthru
      _
    // Predicated region
    $region22: #{tpu_custom_call.1} parent=1 // pred_check
      _
    $region23: #{tpu_custom_call.1} parent=1 // pred_check_branch
      %55 = sbr.rel (0) target = $region25
    $region24: #{tpu_custom_call.1} parent=1 // pred_region
      %s57 = ssub.s32 1024, 1024
      %58 = vsyncadd [#allocation9], %s57
      %s59 = sshll.u32 [#allocation8], 4
      %s60 = int_to_ptr.vmem [resolvable:$true] %s59
      %65 = dma.hbm_to_vmem [thread:$0]  %s5, 1024, %s60, [#allocation9], 64, 64, 4
    $region25: #{tpu_custom_call.1} parent=1 // pred_fallthru
      _
    // Predicated region
    $region26: #{tpu_custom_call.1} parent=1 // pred_check
      _
    $region27: #{tpu_custom_call.1} parent=1 // pred_check_branch
      %67 = sbr.rel (0) target = $region29
    $region28: #{tpu_custom_call.1} parent=1 // pred_region
      _
    $region29: #{tpu_custom_call.1} parent=1 // pred_fallthru
      _
    // Predicated region
    $region30: #{tpu_custom_call.1} parent=1 // pred_check
      _
    $region31: #{tpu_custom_call.1} parent=1 // pred_check_branch
      %69 = sbr.rel (0) target = $region33
    $region32: #{tpu_custom_call.1} parent=1 // pred_region
      %70 = dma.done [#allocation3], 32
    $region33: #{tpu_custom_call.1} parent=1 // pred_fallthru
      _
    // Predicated region
    $region34: #{tpu_custom_call.1} parent=1 // pred_check
      _
    $region35: #{tpu_custom_call.1} parent=1 // pred_check_branch
      %72 = sbr.rel (0) target = $region37
    $region36: #{tpu_custom_call.1} parent=1 // pred_region
      %73 = dma.done [#allocation6], 2048
    $region37: #{tpu_custom_call.1} parent=1 // pred_fallthru
      _
    // Predicated region
    $region38: #{tpu_custom_call.1} parent=1 // pred_check
      _
    $region39: #{tpu_custom_call.1} parent=1 // pred_check_branch
      %75 = sbr.rel (0) target = $region41
    $region40: #{tpu_custom_call.1} parent=1 // pred_region
      %76 = dma.done [#allocation6], 1024
    $region41: #{tpu_custom_call.1} parent=1 // pred_fallthru
      _
    // Predicated region
    $region42: #{tpu_custom_call.1} parent=1 // pred_check
      _
    $region43: #{tpu_custom_call.1} parent=1 // pred_check_branch
      %78 = sbr.rel (0) target = $region45
    $region44: #{tpu_custom_call.1} parent=1 // pred_region
      %79 = dma.done [#allocation9], 1024
    $region45: #{tpu_custom_call.1} parent=1 // pred_fallthru
      _
    %v81 = vld [vmem:[#allocation2] sm:$0x3]
    %v82 = vld [vmem:[#allocation5] sm:$0xf]
    %v83 = vld [vmem:[#allocation5 + $0x4] sm:$0xf]
    %v84 = vld [vmem:[#allocation5 + $0x8] sm:$0xf]
    %v85 = vld [vmem:[#allocation5 + $0xc] sm:$0xf]
    %v86 = vld [vmem:[#allocation5 + $0x10] sm:$0xf]
    %v87 = vld [vmem:[#allocation5 + $0x14] sm:$0xf]
    %v88 = vld [vmem:[#allocation5 + $0x18] sm:$0xf]
    %v89 = vld [vmem:[#allocation5 + $0x1c] sm:$0xf]
    %v90 = vld [vmem:[#allocation5 + $0x20] sm:$0xf]
    %v91 = vld [vmem:[#allocation5 + $0x24] sm:$0xf]
    %v92 = vld [vmem:[#allocation5 + $0x28] sm:$0xf]
    %v93 = vld [vmem:[#allocation5 + $0x2c] sm:$0xf]
    %v94 = vld [vmem:[#allocation5 + $0x30] sm:$0xf]
    %v95 = vld [vmem:[#allocation5 + $0x34] sm:$0xf]
    %v96 = vld [vmem:[#allocation5 + $0x38] sm:$0xf]
    %v97 = vld [vmem:[#allocation5 + $0x3c] sm:$0xf]
    %v98 = vld [vmem:[#allocation5 + $0x40] sm:$0xf]
    %v99 = vld [vmem:[#allocation5 + $0x44] sm:$0xf]
    %v100 = vld [vmem:[#allocation5 + $0x48] sm:$0xf]
    %v101 = vld [vmem:[#allocation5 + $0x4c] sm:$0xf]
    %v102 = vld [vmem:[#allocation5 + $0x50] sm:$0xf]
    %v103 = vld [vmem:[#allocation5 + $0x54] sm:$0xf]
    %v104 = vld [vmem:[#allocation5 + $0x58] sm:$0xf]
    %v105 = vld [vmem:[#allocation5 + $0x5c] sm:$0xf]
    %v106 = vld [vmem:[#allocation5 + $0x60] sm:$0xf]
    %v107 = vld [vmem:[#allocation5 + $0x64] sm:$0xf]
    %v108 = vld [vmem:[#allocation5 + $0x68] sm:$0xf]
    %v109 = vld [vmem:[#allocation5 + $0x6c] sm:$0xf]
    %v110 = vld [vmem:[#allocation5 + $0x70] sm:$0xf]
    %v111 = vld [vmem:[#allocation5 + $0x74] sm:$0xf]
    %v112 = vld [vmem:[#allocation5 + $0x78] sm:$0xf]
    %v113 = vld [vmem:[#allocation5 + $0x7c] sm:$0xf]
    %v114 = vld [vmem:[%s2] sm:$0x1]
    %v116 = vlaneseq
    %v117 = vshrl.u32 %v116, 7
    %v118 = vsub.s32 0, %v117
    %v119 = vrot.slane %v114, %v118
    %v123 = vunpack.c.l.s4 1966171168
    %v124 = vunpack.c.0.s8 %v123
    %v125 = vlaneseq
    %v126 = vshrl.u32 %v125, 7
    %v127 = vsub.s32 %v124, %v126
    %v128 = vrot.slane %v81, %v127
    %v129 = vcombine.high %v128, %v128
    %v131 = vunpack.c.l.s4 1966171168
    %v132 = vunpack.c.0.s8 %v131
    %v133 = vlaneseq
    %v134 = vshrl.u32 %v133, 7
    %v135 = vsub.s32 %v132, %v134
    %v136 = vrot.slane %v128, %v135
    %v138 = vunpack.c.l.s4 1966171168
    %v139 = vunpack.c.0.s8 %v138
    %v140 = vlaneseq
    %v141 = vshrl.u32 %v140, 7
    %v142 = vsub.s32 %v139, %v141
    %v143 = vrot.slane %v129, %v142
    %v178 = vunpack.c.l.b16 %v82
    %v179 = vunpack.c.l.b16 %v83
    %v180 = vunpack.c.l.b16 %v84
    %v181 = vunpack.c.l.b16 %v85
    %v182 = vunpack.c.l.b16 %v86
    %v183 = vunpack.c.l.b16 %v87
    %v184 = vunpack.c.l.b16 %v88
    %v185 = vunpack.c.l.b16 %v89
    %v186 = vunpack.c.l.b16 %v90
    %v187 = vunpack.c.l.b16 %v91
    %v188 = vunpack.c.l.b16 %v92
    %v189 = vunpack.c.l.b16 %v93
    %v190 = vunpack.c.l.b16 %v94
    %v191 = vunpack.c.l.b16 %v95
    %v192 = vunpack.c.l.b16 %v96
    %v193 = vunpack.c.l.b16 %v97
    %v194 = vunpack.c.l.b16 %v98
    %v195 = vunpack.c.l.b16 %v99
    %v196 = vunpack.c.l.b16 %v100
    %v197 = vunpack.c.l.b16 %v101
    %v198 = vunpack.c.l.b16 %v102
    %v199 = vunpack.c.l.b16 %v103
    %v200 = vunpack.c.l.b16 %v104
    %v201 = vunpack.c.l.b16 %v105
    %v202 = vunpack.c.l.b16 %v106
    %v203 = vunpack.c.l.b16 %v107
    %v204 = vunpack.c.l.b16 %v108
    %v205 = vunpack.c.l.b16 %v109
    %v206 = vunpack.c.l.b16 %v110
    %v207 = vunpack.c.l.b16 %v111
    %v208 = vunpack.c.l.b16 %v112
    %v209 = vunpack.c.l.b16 %v113
    %v210 = vpack.c.b16 %v179, %v178
    %v211 = vpack.c.b16 %v181, %v180
    %v212 = vpack.c.b16 %v183, %v182
    %v213 = vpack.c.b16 %v185, %v184
    %v214 = vpack.c.b16 %v187, %v186
    %v215 = vpack.c.b16 %v189, %v188
    %v216 = vpack.c.b16 %v191, %v190
    %v217 = vpack.c.b16 %v193, %v192
    %v218 = vpack.c.b16 %v195, %v194
    %v219 = vpack.c.b16 %v197, %v196
    %v220 = vpack.c.b16 %v199, %v198
    %v221 = vpack.c.b16 %v201, %v200
    %v222 = vpack.c.b16 %v203, %v202
    %v223 = vpack.c.b16 %v205, %v204
    %v224 = vpack.c.b16 %v207, %v206
    %v225 = vpack.c.b16 %v209, %v208
    %242 = vmatprep.subr.bf16.mxu0 0
    %243 = vmatpush1.bf16.msra.mxu0 %v210
    %244 = vmatprep.subr.bf16.mxu0 0
    %245 = vmatpush1.bf16.msra.mxu0 %v211
    %246 = vmatprep.subr.bf16.mxu0 0
    %247 = vmatpush1.bf16.msra.mxu0 %v212
    %248 = vmatprep.subr.bf16.mxu0 0
    %249 = vmatpush1.bf16.msra.mxu0 %v213
    %250 = vmatprep.subr.bf16.mxu0 0
    %251 = vmatpush1.bf16.msra.mxu0 %v214
    %252 = vmatprep.subr.bf16.mxu0 0
    %253 = vmatpush1.bf16.msra.mxu0 %v215
    %254 = vmatprep.subr.bf16.mxu0 0
    %255 = vmatpush1.bf16.msra.mxu0 %v216
    %256 = vmatprep.subr.bf16.mxu0 0
    %257 = vmatpush1.bf16.msra.mxu0 %v217
    %258 = vmatprep.subr.bf16.mxu0 0
    %259 = vmatpush1.bf16.msra.mxu0 %v218
    %260 = vmatprep.subr.bf16.mxu0 0
    %261 = vmatpush1.bf16.msra.mxu0 %v219
    %262 = vmatprep.subr.bf16.mxu0 0
    %263 = vmatpush1.bf16.msra.mxu0 %v220
    %264 = vmatprep.subr.bf16.mxu0 0
    %265 = vmatpush1.bf16.msra.mxu0 %v221
    %266 = vmatprep.subr.bf16.mxu0 0
    %267 = vmatpush1.bf16.msra.mxu0 %v222
    %268 = vmatprep.subr.bf16.mxu0 0
    %269 = vmatpush1.bf16.msra.mxu0 %v223
    %270 = vmatprep.subr.bf16.mxu0 0
    %271 = vmatpush1.bf16.msra.mxu0 %v224
    %272 = vmatprep.subr.bf16.mxu0 0
    %273 = vmatpush1.bf16.msra.mxu0 %v225
    %274 = vmatprep.mubr.bf16.mxu0 %v143
    %275 = vmatmul.mubr.bf16.gmra.mrb[0].mxu0 %v136
    %v276 = vpop.f32.mrb[0].mxu0
    %v277 = vadd.f32 %v119, %v276
    %v278 = vpop.f32.mrb[0].mxu0
    %v279 = vpop.f32.mrb[0].mxu0
    %v280 = vpop.f32.mrb[0].mxu0
    %281 = vdwg.mxu0
    %v282 = vmax.f32 %v277, 0.0
    %v283 = vpack.c.bf16 %v282, %v282
    %v284 = vld [vmem:[#allocation7] sm:$0xf]
    %v285 = vld [vmem:[#allocation7 + $0x4] sm:$0xf]
    %v286 = vld [vmem:[#allocation7 + $0x8] sm:$0xf]
    %v287 = vld [vmem:[#allocation7 + $0xc] sm:$0xf]
    %v288 = vld [vmem:[#allocation7 + $0x10] sm:$0xf]
    %v289 = vld [vmem:[#allocation7 + $0x14] sm:$0xf]
    %v290 = vld [vmem:[#allocation7 + $0x18] sm:$0xf]
    %v291 = vld [vmem:[#allocation7 + $0x1c] sm:$0xf]
    %v292 = vld [vmem:[#allocation7 + $0x20] sm:$0xf]
    %v293 = vld [vmem:[#allocation7 + $0x24] sm:$0xf]
    %v294 = vld [vmem:[#allocation7 + $0x28] sm:$0xf]
    %v295 = vld [vmem:[#allocation7 + $0x2c] sm:$0xf]
    %v296 = vld [vmem:[#allocation7 + $0x30] sm:$0xf]
    %v297 = vld [vmem:[#allocation7 + $0x34] sm:$0xf]
    %v298 = vld [vmem:[#allocation7 + $0x38] sm:$0xf]
    %v299 = vld [vmem:[#allocation7 + $0x3c] sm:$0xf]
    %v300 = vld [vmem:[%s4] sm:$0x1]
    %v302 = vlaneseq
    %v303 = vshrl.u32 %v302, 7
    %v304 = vsub.s32 0, %v303
    %v305 = vrot.slane %v300, %v304
    %v323 = vunpack.c.l.b16 %v284
    %v324 = vunpack.c.l.b16 %v285
    %v325 = vunpack.c.l.b16 %v286
    %v326 = vunpack.c.l.b16 %v287
    %v327 = vunpack.c.l.b16 %v288
    %v328 = vunpack.c.l.b16 %v289
    %v329 = vunpack.c.l.b16 %v290
    %v330 = vunpack.c.l.b16 %v291
    %v331 = vunpack.c.l.b16 %v292
    %v332 = vunpack.c.l.b16 %v293
    %v333 = vunpack.c.l.b16 %v294
    %v334 = vunpack.c.l.b16 %v295
    %v335 = vunpack.c.l.b16 %v296
    %v336 = vunpack.c.l.b16 %v297
    %v337 = vunpack.c.l.b16 %v298
    %v338 = vunpack.c.l.b16 %v299
    %v339 = vpack.c.b16 %v324, %v323
    %v340 = vpack.c.b16 %v326, %v325
    %v341 = vpack.c.b16 %v328, %v327
    %v342 = vpack.c.b16 %v330, %v329
    %v343 = vpack.c.b16 %v332, %v331
    %v344 = vpack.c.b16 %v334, %v333
    %v345 = vpack.c.b16 %v336, %v335
    %v346 = vpack.c.b16 %v338, %v337
    %355 = vmatprep.subr.bf16.mxu0 0
    %356 = vmatpush1.bf16.msra.mxu0 %v339
    %357 = vmatprep.subr.bf16.mxu0 0
    %358 = vmatpush1.bf16.msra.mxu0 %v340
    %359 = vmatprep.subr.bf16.mxu0 0
    %360 = vmatpush1.bf16.msra.mxu0 %v341
    %361 = vmatprep.subr.bf16.mxu0 0
    %362 = vmatpush1.bf16.msra.mxu0 %v342
    %363 = vmatprep.subr.bf16.mxu0 0
    %364 = vmatpush1.bf16.msra.mxu0 %v343
    %365 = vmatprep.subr.bf16.mxu0 0
    %366 = vmatpush1.bf16.msra.mxu0 %v344
    %367 = vmatprep.subr.bf16.mxu0 0
    %368 = vmatpush1.bf16.msra.mxu0 %v345
    %369 = vmatprep.subr.bf16.mxu0 0
    %370 = vmatpush1.bf16.msra.mxu0 %v346
    %371 = vmatprep.subr.bf16.mxu0 0
    %372 = vmatpush1.bf16.msra.mxu0 0
    %373 = vmatprep.subr.bf16.mxu0 0
    %374 = vmatpush1.bf16.msra.mxu0 0
    %375 = vmatprep.subr.bf16.mxu0 0
    %376 = vmatpush1.bf16.msra.mxu0 0
    %377 = vmatprep.subr.bf16.mxu0 0
    %378 = vmatpush1.bf16.msra.mxu0 0
    %379 = vmatprep.subr.bf16.mxu0 0
    %380 = vmatpush1.bf16.msra.mxu0 0
    %381 = vmatprep.subr.bf16.mxu0 0
    %382 = vmatpush1.bf16.msra.mxu0 0
    %383 = vmatprep.subr.bf16.mxu0 0
    %384 = vmatpush1.bf16.msra.mxu0 0
    %385 = vmatprep.subr.bf16.mxu0 0
    %386 = vmatpush1.bf16.msra.mxu0 0
    %387 = vmatprep.mubr.bf16.mxu0 0
    %388 = vmatmul.mubr.bf16.gmra.mrb[0].mxu0 %v283
    %v389 = vpop.f32.mrb[0].mxu0
    %v390 = vadd.f32 %v305, %v389
    %v391 = vpop.f32.mrb[0].mxu0
    %v392 = vpop.f32.mrb[0].mxu0
    %v393 = vpop.f32.mrb[0].mxu0
    %394 = vdwg.mxu0
    %v395 = vmax.f32 %v390, 0.0
    %v396 = vpack.c.bf16 %v395, %v395
    %v397 = vld [vmem:[#allocation8] sm:$0xf]
    %v398 = vld [vmem:[#allocation8 + $0x4] sm:$0xf]
    %v399 = vld [vmem:[#allocation8 + $0x8] sm:$0xf]
    %v400 = vld [vmem:[#allocation8 + $0xc] sm:$0xf]
    %v401 = vld [vmem:[#allocation8 + $0x10] sm:$0xf]
    %v402 = vld [vmem:[#allocation8 + $0x14] sm:$0xf]
    %v403 = vld [vmem:[#allocation8 + $0x18] sm:$0xf]
    %v404 = vld [vmem:[#allocation8 + $0x1c] sm:$0xf]
    %v405 = vld [vmem:[#allocation8 + $0x20] sm:$0xf]
    %v406 = vld [vmem:[#allocation8 + $0x24] sm:$0xf]
    %v407 = vld [vmem:[#allocation8 + $0x28] sm:$0xf]
    %v408 = vld [vmem:[#allocation8 + $0x2c] sm:$0xf]
    %v409 = vld [vmem:[#allocation8 + $0x30] sm:$0xf]
    %v410 = vld [vmem:[#allocation8 + $0x34] sm:$0xf]
    %v411 = vld [vmem:[#allocation8 + $0x38] sm:$0xf]
    %v412 = vld [vmem:[#allocation8 + $0x3c] sm:$0xf]
    %v413 = vld [vmem:[%s6] sm:$0x1]
    %v415 = vlaneseq
    %v416 = vshrl.u32 %v415, 7
    %v417 = vsub.s32 0, %v416
    %v418 = vrot.slane %v413, %v417
    %v436 = vunpack.c.l.b16 %v397
    %v437 = vunpack.c.l.b16 %v398
    %v438 = vunpack.c.l.b16 %v399
    %v439 = vunpack.c.l.b16 %v400
    %v440 = vunpack.c.l.b16 %v401
    %v441 = vunpack.c.l.b16 %v402
    %v442 = vunpack.c.l.b16 %v403
    %v443 = vunpack.c.l.b16 %v404
    %v444 = vunpack.c.l.b16 %v405
    %v445 = vunpack.c.l.b16 %v406
    %v446 = vunpack.c.l.b16 %v407
    %v447 = vunpack.c.l.b16 %v408
    %v448 = vunpack.c.l.b16 %v409
    %v449 = vunpack.c.l.b16 %v410
    %v450 = vunpack.c.l.b16 %v411
    %v451 = vunpack.c.l.b16 %v412
    %v452 = vpack.c.b16 %v437, %v436
    %v453 = vpack.c.b16 %v439, %v438
    %v454 = vpack.c.b16 %v441, %v440
    %v455 = vpack.c.b16 %v443, %v442
    %v456 = vpack.c.b16 %v445, %v444
    %v457 = vpack.c.b16 %v447, %v446
    %v458 = vpack.c.b16 %v449, %v448
    %v459 = vpack.c.b16 %v451, %v450
    %468 = vmatprep.subr.bf16.mxu0 0
    %469 = vmatpush1.bf16.msra.mxu0 %v452
    %470 = vmatprep.subr.bf16.mxu0 0
    %471 = vmatpush1.bf16.msra.mxu0 %v453
    %472 = vmatprep.subr.bf16.mxu0 0
    %473 = vmatpush1.bf16.msra.mxu0 %v454
    %474 = vmatprep.subr.bf16.mxu0 0
    %475 = vmatpush1.bf16.msra.mxu0 %v455
    %476 = vmatprep.subr.bf16.mxu0 0
    %477 = vmatpush1.bf16.msra.mxu0 %v456
    %478 = vmatprep.subr.bf16.mxu0 0
    %479 = vmatpush1.bf16.msra.mxu0 %v457
    %480 = vmatprep.subr.bf16.mxu0 0
    %481 = vmatpush1.bf16.msra.mxu0 %v458
    %482 = vmatprep.subr.bf16.mxu0 0
    %483 = vmatpush1.bf16.msra.mxu0 %v459
    %484 = vmatprep.subr.bf16.mxu0 0
    %485 = vmatpush1.bf16.msra.mxu0 0
    %486 = vmatprep.subr.bf16.mxu0 0
    %487 = vmatpush1.bf16.msra.mxu0 0
    %488 = vmatprep.subr.bf16.mxu0 0
    %489 = vmatpush1.bf16.msra.mxu0 0
    %490 = vmatprep.subr.bf16.mxu0 0
    %491 = vmatpush1.bf16.msra.mxu0 0
    %492 = vmatprep.subr.bf16.mxu0 0
    %493 = vmatpush1.bf16.msra.mxu0 0
    %494 = vmatprep.subr.bf16.mxu0 0
    %495 = vmatpush1.bf16.msra.mxu0 0
    %496 = vmatprep.subr.bf16.mxu0 0
    %497 = vmatpush1.bf16.msra.mxu0 0
    %498 = vmatprep.subr.bf16.mxu0 0
    %499 = vmatpush1.bf16.msra.mxu0 0
    %500 = vmatprep.mubr.bf16.mxu0 0
    %501 = vmatmul.mubr.bf16.gmra.mrb[0].mxu0 %v396
    %v502 = vpop.f32.mrb[0].mxu0
    %v503 = vadd.f32 %v418, %v502
    %v504 = vpop.f32.mrb[0].mxu0
    %v505 = vpop.f32.mrb[0].mxu0
    %v506 = vpop.f32.mrb[0].mxu0
    %507 = vdwg.mxu0
    %508 = vst [vmem:[#allocation10] sm:$0x3] %v503
    // Predicated region
    $region46: #{tpu_custom_call.1} parent=1 // pred_check
      _
    $region47: #{tpu_custom_call.1} parent=1 // pred_check_branch
      %510 = sbr.rel (0) target = $region49
    $region48: #{tpu_custom_call.1} parent=1 // pred_region
      %s512 = ssub.s32 32, 32
      %513 = vsyncadd [#allocation4], %s512
      %s515 = sshll.u32 [#allocation10], 4
      %s516 = int_to_ptr.vmem [resolvable:$true] %s515
      %518 = dma.vmem_to_hbm [thread:$0]  %s516, 32, %s7, [#allocation4]
    $region49: #{tpu_custom_call.1} parent=1 // pred_fallthru
      _
    // Predicated region
    $region50: #{tpu_custom_call.1} parent=1 // pred_check
      _
    $region51: #{tpu_custom_call.1} parent=1 // pred_check_branch
      %520 = sbr.rel (0) target = $region53
    $region52: #{tpu_custom_call.1} parent=1 // pred_region
      %521 = dma.done [#allocation4], 32
    $region53: #{tpu_custom_call.1} parent=1 // pred_fallthru
      _
    %522 = vsyncpa [#allocation3], 1
    %523 = vsyncpa [#allocation6], 1
    %524 = vsyncpa [#allocation9], 1
    %525 = vsyncpa [#allocation4], 1

</llo_original>
